<compile_context>
chip_gen: v7x
topology: tpu7x:2x2x1
jax: 0.10.0
libtpu: 0.0.40
codegen_flags: <defaults>
</compile_context>

<pallas_src>
import functools

import jax
import jax.numpy as jnp
import numpy as np
from jax.experimental import pallas as pl
from jax.experimental.pallas import tpu as pltpu


def _primary_caps_kernel(w_ref, b_ref, s_ref, p_ref, out_ref):
    # w_ref:   (Ctot, K)      bf16  conv weights as GEMM matrix (resident)
    # b_ref:   (Ctot, 1)      f32   conv bias (resident)
    # s_ref:   (Ctot, Ctot)   f32   capsule-sum 0/1 matrix (resident)
    # p_ref:   (K, tile_M)    bf16  im2col patches, flattened M on lanes
    # out_ref: (Ctot, tile_M) f32   squashed conv output
    conv = jnp.dot(w_ref[...], p_ref[...],
                   preferred_element_type=jnp.float32) + b_ref[...]

    # Squared norm over the capsule dimension, broadcast back to full width.
    # Row layout is ch = cap*OC + oc, and S[i, j] = 1 iff i % OC == j % OC, so
    # sqn[ch, m] = sum_cap conv[cap*OC + oc(ch), m]^2 for every ch.
    sqn = jnp.dot(s_ref[...], conv * conv,
                  preferred_element_type=jnp.float32,
                  precision=jax.lax.Precision.HIGHEST)

    # squash scale = sqn / (1 + sqn) / sqrt(sqn), in rsqrt / reciprocal (EUP)
    # form. NOTE: an exactly-zero capsule vector yields NaN, matching the
    # PyTorch module's behavior.
    scale = sqn * jax.lax.rsqrt(sqn) * pl.reciprocal(1.0 + sqn, approx=True)

    out_ref[...] = (conv * scale).astype(out_ref.dtype)  # one lane-dense store


def _im2col_T(x, kh, kw, stride):
    """x: (B, C, H, W) -> patches_T (C*kh*kw, B*Hout*Wout).

    K rows ordered (C, kh, kw) to match Conv2d weight.reshape(Ctot, C*kh*kw);
    M columns ordered (B, Hout, Wout).
    """
    B, C, H, W = x.shape
    Hout = (H - kh) // stride + 1
    Wout = (W - kw) // stride + 1
    cols = []
    for u in range(kh):
        for v in range(kw):
            cols.append(x[:, :, u:u + stride * Hout:stride,
                            v:v + stride * Wout:stride])   # (B, C, Hout, Wout)
    p = jnp.stack(cols, axis=0).reshape(kh, kw, B, C, Hout, Wout)
    p = p.transpose(3, 0, 1, 2, 4, 5).reshape(C * kh * kw, B * Hout * Wout)
    return p, Hout, Wout


def _choose_tile_m(m_rows):
    # Lane-dense output needs tile_M % 128 == 0. Prefer big tiles (amortize the
    # ~0.35us grid-step overhead) but keep >=2 blocks when possible so v7x's
    # two TensorCores both get work. VMEM per double-buffered tile is a few
    # hundred KB at most here, far below even v7x's 32 MiB default scoped VMEM.
    for t in (512, 256, 128):
        if m_rows >= 2 * t:
            return t
    return 128


@functools.partial(jax.jit,
                   static_argnames=("num_capsules", "out_channels", "stride"))
def primary_caps_forward(x, weight, bias, *, num_capsules, out_channels, stride):
    """Pallas implementation of PrimaryCaps.forward.

    x:      (B, Cin, H, W)                          NCHW, float32
    weight: (num_capsules*out_channels, Cin, kh, kw)
    bias:   (num_capsules*out_channels,)
    returns (B, out_channels*Hout*Wout, num_capsules)   (PyTorch semantics)
    """
    Ctot, Cin, kh, kw = weight.shape
    assert Ctot == num_capsules * out_channels
    B = x.shape[0]
    K = Cin * kh * kw

    # im2col in bf16 so the ~9x-expanded patch tensor costs half the HBM bytes.
    # TODO(synk): extract patches in-kernel (BlockSpec over the NCHW input +
    # strided reads) to avoid materializing the im2col expansion in HBM at all.
    patches_T, Hout, Wout = _im2col_T(x.astype(jnp.bfloat16), kh, kw, stride)
    P = Hout * Wout
    M = B * P

    tile_m = _choose_tile_m(M)
    num_blocks = pl.cdiv(M, tile_m)
    M_pad = num_blocks * tile_m
    patches_T = jnp.pad(patches_T, ((0, 0), (0, M_pad - M)))   # zero columns

    w_mat = weight.reshape(Ctot, K).astype(jnp.bfloat16)        # (Ctot, K)
    b_mat = bias.reshape(Ctot, 1).astype(jnp.float32)           # (Ctot, 1)
    idx = jnp.arange(Ctot)
    s_mat = (idx[:, None] % out_channels ==
             idx[None, :] % out_channels).astype(jnp.float32)   # (Ctot, Ctot)

    out_T = pl.pallas_call(
        _primary_caps_kernel,
        out_shape=jax.ShapeDtypeStruct((Ctot, M_pad), jnp.float32),
        grid_spec=pltpu.PrefetchScalarGridSpec(
            num_scalar_prefetch=0,
            grid=(num_blocks,),
            in_specs=[
                pl.BlockSpec((Ctot, K), lambda m: (0, 0)),      # weights
                pl.BlockSpec((Ctot, 1), lambda m: (0, 0)),      # bias
                pl.BlockSpec((Ctot, Ctot), lambda m: (0, 0)),   # capsule-sum S
                pl.BlockSpec((K, tile_m), lambda m: (0, m)),    # patches
            ],
            out_specs=pl.BlockSpec((Ctot, tile_m), lambda m: (0, m)),
        ),
        compiler_params=pltpu.CompilerParams(
            dimension_semantics=("parallel",)),
    )(w_mat, b_mat, s_mat, patches_T)

    # Kernel output: out_T[cap*OC + oc, b*P + hw].
    # PyTorch output: out_pt[b, oc*P + hw, cap]. Pure layout plumbing (glue).
    out_T = out_T[:, :M]
    out_pt = out_T.reshape(num_capsules, out_channels, B, P)
    out_pt = out_pt.transpose(2, 1, 3, 0).reshape(
        B, out_channels * P, num_capsules)
    return out_pt


def _reference(x, weight, bias, *, num_capsules, out_channels, stride):
    """Pure-JAX reference mirroring the PyTorch module. GEMM inputs are cast
    to bf16 exactly like the kernel feed; accumulation, bias add and squash
    stay in f32, matching the kernel's numerics."""
    conv = jax.lax.conv_general_dilated(
        x.astype(jnp.bfloat16), weight.astype(jnp.bfloat16),
        window_strides=(stride, stride), padding="VALID",
        dimension_numbers=("NCHW", "OIHW", "NCHW"),
        preferred_element_type=jnp.float32)
    conv = conv + bias.astype(jnp.float32)[None, :, None, None]
    B = x.shape[0]
    t = conv.reshape(B, num_capsules, -1).transpose(0, 2, 1)  # (B, OC*P, caps)
    sq = (t ** 2).sum(axis=-1, keepdims=True)
    return sq / (1.0 + sq) * t / jnp.sqrt(sq)


if __name__ == "__main__":
    # Module config (small, consistent with PrimaryCaps(__init__) signature)
    NUM_CAPSULES = 8
    IN_CHANNELS = 4
    OUT_CHANNELS = 4
    KERNEL_SIZE = 3
    STRIDE = 2

    B, H, W = 2, 16, 16
    CTOT = NUM_CAPSULES * OUT_CHANNELS

    key = jax.random.PRNGKey(0)
    kx, kw_, kb_ = jax.random.split(key, 3)
    x = jax.random.normal(kx, (B, IN_CHANNELS, H, W), dtype=jnp.float32)
    weight = 0.1 * jax.random.normal(
        kw_, (CTOT, IN_CHANNELS, KERNEL_SIZE, KERNEL_SIZE), dtype=jnp.float32)
    bias = 0.1 * jax.random.normal(kb_, (CTOT,), dtype=jnp.float32)

    out = primary_caps_forward(
        x, weight, bias,
        num_capsules=NUM_CAPSULES, out_channels=OUT_CHANNELS, stride=STRIDE)
    out = jax.block_until_ready(out)

    ref = _reference(
        x, weight, bias,
        num_capsules=NUM_CAPSULES, out_channels=OUT_CHANNELS, stride=STRIDE)
    ref = jax.block_until_ready(ref)

    assert out.shape == ref.shape, (out.shape, ref.shape)
    # Both sides use bf16 GEMM operands with f32 accumulation; the residual
    # difference is dominated by the approximate EUP reciprocal in the kernel.
    np.testing.assert_allclose(np.asarray(out), np.asarray(ref),
                               rtol=5e-3, atol=1e-3)
    print("KERNEL_OK")
</pallas_src>

<mosaic_0001>
module attributes {stable_mosaic.version = 11 : i64} {
  func.func @_primary_caps_kernel(%arg0: i32, %arg1: memref<32x36xbf16, #tpu.memory_space<vmem>>, %arg2: memref<32x1xf32, #tpu.memory_space<vmem>>, %arg3: memref<32x32xf32, #tpu.memory_space<vmem>>, %arg4: memref<36x128xbf16, #tpu.memory_space<vmem>>, %arg5: memref<32x128xf32, #tpu.memory_space<vmem>>) attributes {dimension_semantics = [#tpu.dimension_semantics<parallel>], iteration_bounds = array<i64: 1>, scalar_prefetch = 0 : i64, scratch_operands = 0 : i64, tpu.core_type = #tpu.core_type<tc>, window_params = [{pipeline_mode = #tpu.pipeline_mode<synchronous>, transform_indices = @transform_0, window_bounds = array<i64: 32, 36>}, {pipeline_mode = #tpu.pipeline_mode<synchronous>, transform_indices = @transform_1, window_bounds = array<i64: 32, 1>}, {pipeline_mode = #tpu.pipeline_mode<synchronous>, transform_indices = @transform_2, window_bounds = array<i64: 32, 32>}, {transform_indices = @transform_3, window_bounds = array<i64: 36, 128>}, {transform_indices = @transform_4, window_bounds = array<i64: 32, 128>}]} {
    %c0 = arith.constant 0 : index
    %c0_0 = arith.constant 0 : index
    %0 = vector.load %arg1[%c0, %c0_0] : memref<32x36xbf16, #tpu.memory_space<vmem>>, vector<32x36xbf16>
    %c0_1 = arith.constant 0 : index
    %c0_2 = arith.constant 0 : index
    %1 = vector.load %arg4[%c0_1, %c0_2] : memref<36x128xbf16, #tpu.memory_space<vmem>>, vector<36x128xbf16>
    %cst = arith.constant dense<0.000000e+00> : vector<32x128xf32>
    %2 = tpu.matmul %0, %1, %cst {dimension_numbers = #tpu.dot_dimension_numbers<[1], [0], [0], [1], [0, 0, 1, 1], [], []>} : vector<32x36xbf16>, vector<36x128xbf16>, vector<32x128xf32> -> vector<32x128xf32>
    %c0_3 = arith.constant 0 : index
    %c0_4 = arith.constant 0 : index
    %3 = vector.load %arg2[%c0_3, %c0_4] : memref<32x1xf32, #tpu.memory_space<vmem>>, vector<32x1xf32>
    %4 = vector.broadcast %3 : vector<32x1xf32> to vector<32x128xf32>
    %5 = arith.addf %2, %4 : vector<32x128xf32>
    %c0_5 = arith.constant 0 : index
    %c0_6 = arith.constant 0 : index
    %6 = vector.load %arg3[%c0_5, %c0_6] : memref<32x32xf32, #tpu.memory_space<vmem>>, vector<32x32xf32>
    %7 = arith.mulf %5, %5 : vector<32x128xf32>
    %cst_7 = arith.constant dense<0.000000e+00> : vector<32x128xf32>
    %8 = tpu.matmul %6, %7, %cst_7 {dimension_numbers = #tpu.dot_dimension_numbers<[1], [0], [0], [1], [0, 0, 1, 1], [], []>, precision = #tpu.contract_precision<fp32>} : vector<32x32xf32>, vector<32x128xf32>, vector<32x128xf32> -> vector<32x128xf32>
    %9 = math.rsqrt %8 : vector<32x128xf32>
    %10 = arith.mulf %8, %9 : vector<32x128xf32>
    %cst_8 = arith.constant 1.000000e+00 : f32
    %11 = vector.broadcast %cst_8 : f32 to vector<32x128xf32>
    %12 = arith.addf %11, %8 : vector<32x128xf32>
    %13 = tpu.reciprocal %12 {approx = true} : vector<32x128xf32> -> vector<32x128xf32>
    %14 = arith.mulf %10, %13 : vector<32x128xf32>
    %15 = arith.mulf %5, %14 : vector<32x128xf32>
    %c0_9 = arith.constant 0 : index
    %c0_10 = arith.constant 0 : index
    %16 = vector.load %arg5[%c0_9, %c0_10] : memref<32x128xf32, #tpu.memory_space<vmem>>, vector<32x128xf32>
    tpu.vector_store %arg5[%c0_9, %c0_10], %15 {strides = array<i32>} : memref<32x128xf32, #tpu.memory_space<vmem>>, vector<32x128xf32>,
    return
  }
  func.func @transform_0(%arg0: i32) -> (i32, i32) {
    %c0_i32 = arith.constant 0 : i32
    %c0_i32_0 = arith.constant 0 : i32
    %c0_i32_1 = arith.constant 0 : i32
    return %c0_i32, %c0_i32_0 : i32, i32
  }
  func.func @transform_1(%arg0: i32) -> (i32, i32) {
    %c0_i32 = arith.constant 0 : i32
    %c0_i32_0 = arith.constant 0 : i32
    %c0_i32_1 = arith.constant 0 : i32
    return %c0_i32, %c0_i32_0 : i32, i32
  }
  func.func @transform_2(%arg0: i32) -> (i32, i32) {
    %c0_i32 = arith.constant 0 : i32
    %c0_i32_0 = arith.constant 0 : i32
    %c0_i32_1 = arith.constant 0 : i32
    return %c0_i32, %c0_i32_0 : i32, i32
  }
  func.func @transform_3(%arg0: i32) -> (i32, i32) {
    %c0_i32 = arith.constant 0 : i32
    %c0_i32_0 = arith.constant 0 : i32
    return %c0_i32, %arg0 : i32, i32
  }
  func.func @transform_4(%arg0: i32) -> (i32, i32) {
    %c0_i32 = arith.constant 0 : i32
    %c0_i32_0 = arith.constant 0 : i32
    return %c0_i32, %arg0 : i32, i32
  }
}

</mosaic_0001>

<llo_original>
// kernel: primary_caps_forward.1
$region0: #{primary_caps_forward.1}
  #allocation0 [shape = 'u32[]', space=smem, size = 0x4, offset = 0x4, fixed_abs, tag = 'smem constant byte address 0x4 - core index']
  #allocation1 [shape = 'u32[144,128]{1,0:T(1,128)}', space=vmem, size = 0x12000, scoped, tag = 'internal scratch']
  %s0 = inlined_call_operand.vmem [shape: bf16[32,36], index: 0, kind: input, shape index: {}]
  %s1 = inlined_call_operand.vmem [shape: f32[32,1], index: 1, kind: input, shape index: {}]
  %s2 = inlined_call_operand.vmem [shape: f32[32,32], index: 2, kind: input, shape index: {}]
  %s3 = inlined_call_operand.vmem [shape: bf16[36,128], index: 3, kind: input, shape index: {}]
  %s4 = inlined_call_operand.vmem [shape: f32[32,128], index: 4, kind: output, shape index: {}]
  %s5 = sld [smem:[#allocation0]]
  $region26: #{primary_caps_forward.1} parent=0
    _
  %s7 = ssub.s32 1, %s5
  %s8 = scalar_select 0, %s7, %s5
  // Predicated region
  $region2: #{primary_caps_forward.1} parent=0 // pred_check
    _
  $region3: #{primary_caps_forward.1} parent=0 // pred_check_branch
    %10 = sbr.rel (0) target = $region5
  $region4: #{primary_caps_forward.1} parent=0 // pred_region
    _
  $region5: #{primary_caps_forward.1} parent=0 // pred_fallthru
    _
  // Predicated region
  $region6: #{primary_caps_forward.1} parent=0 // pred_check
    _
  $region7: #{primary_caps_forward.1} parent=0 // pred_check_branch
    %12 = sbr.rel (0) target = $region9
  $region8: #{primary_caps_forward.1} parent=0 // pred_region
    _
  $region9: #{primary_caps_forward.1} parent=0 // pred_fallthru
    _
  // Predicated region
  $region10: #{primary_caps_forward.1} parent=0 // pred_check
    _
  $region11: #{primary_caps_forward.1} parent=0 // pred_check_branch
    %14 = sbr.rel (0) target = $region13
  $region12: #{primary_caps_forward.1} parent=0 // pred_region
    _
  $region13: #{primary_caps_forward.1} parent=0 // pred_fallthru
    _
  // Predicated region
  $region14: #{primary_caps_forward.1} parent=0 // pred_check
    _
  $region15: #{primary_caps_forward.1} parent=0 // pred_check_branch
    %16 = sbr.rel (0) target = $region17
  $region16: #{primary_caps_forward.1} parent=0 // pred_region
    _
  $region17: #{primary_caps_forward.1} parent=0 // pred_fallthru
    _
  %v18 = vld [vmem:[%s0] sm:$0xf]
  %v19 = vld [vmem:[%s0 + $0x4] sm:$0xf]
  %v20 = vld [vmem:[%s0 + $0x8] sm:$0xf]
  %v21 = vld [vmem:[%s0 + $0xc] sm:$0xf]
  %v22 = vld [vmem:[%s3] sm:$0xf]
  %v23 = vld [vmem:[%s3 + $0x4] sm:$0xf]
  %v24 = vld [vmem:[%s3 + $0x8] sm:$0xf]
  %v25 = vld [vmem:[%s3 + $0xc] sm:$0xf]
  %v26 = vld [vmem:[%s3 + $0x10] sm:$0x3]
  %v27 = vld [vmem:[%s1] sm:$0xff]
  %v28 = vld [vmem:[%s1 + $0x8] sm:$0xff]
  %v29 = vld [vmem:[%s1 + $0x10] sm:$0xff]
  %v30 = vld [vmem:[%s1 + $0x18] sm:$0xff]
  %32 = vset.pattern.permute.xlu0 0
  %33 = vperm.xlu0 %32, %v27
  %v34 = vpop.permute.xlu0 %33
  %37 = vset.pattern.permute.xlu0 0
  %38 = vperm.xlu0 %37, %v28
  %v39 = vpop.permute.xlu0 %38
  %42 = vset.pattern.permute.xlu0 0
  %43 = vperm.xlu0 %42, %v29
  %v44 = vpop.permute.xlu0 %43
  %47 = vset.pattern.permute.xlu0 0
  %48 = vperm.xlu0 %47, %v30
  %v49 = vpop.permute.xlu0 %48
  %v55 = vunpack.c.l.b16 %v18
  %v56 = vunpack.c.l.b16 %v19
  %v57 = vunpack.c.l.b16 %v20
  %v58 = vunpack.c.l.b16 %v21
  %v59 = vpack.c.b16 %v56, %v55
  %v60 = vpack.c.b16 %v58, %v57
  %v66 = vunpack.c.l.b16 %v22
  %v67 = vunpack.c.l.b16 %v23
  %v68 = vunpack.c.l.b16 %v24
  %v69 = vunpack.c.l.b16 %v25
  %v70 = vunpack.c.l.b16 %v26
  %v71 = vpack.c.b16 %v67, %v66
  %v72 = vpack.c.b16 %v69, %v68
  %v73 = vpack.c.b16 %v70, %v70
  %vm76 = vcmask 293888
  %v78 = vsel %vm76, %v59, 0
  %v81 = vsel %vm76, %v60, 0
  %vm83 = vcmask 1041408
  %v85 = vsel %vm83, %v73, 0
  %87 = vmatprep.subr.bf16.mxu0 0
  %88 = vmatpush1.bf16.msra.mxu0 %v71
  %89 = vmatprep.subr.bf16.mxu0 0
  %90 = vmatpush1.bf16.msra.mxu0 %v72
  %91 = vmatprep.subr.bf16.mxu0 0
  %92 = vmatpush1.bf16.msra.mxu0 %v85
  %93 = vmatprep.subr.bf16.mxu0 0
  %94 = vmatpush1.bf16.msra.mxu0 0
  %95 = vmatprep.subr.bf16.mxu0 0
  %96 = vmatpush1.bf16.msra.mxu0 0
  %97 = vmatprep.subr.bf16.mxu0 0
  %98 = vmatpush1.bf16.msra.mxu0 0
  %99 = vmatprep.subr.bf16.mxu0 0
  %100 = vmatpush1.bf16.msra.mxu0 0
  %101 = vmatprep.subr.bf16.mxu0 0
  %102 = vmatpush1.bf16.msra.mxu0 0
  %103 = vmatprep.subr.bf16.mxu0 0
  %104 = vmatpush1.bf16.msra.mxu0 0
  %105 = vmatprep.subr.bf16.mxu0 0
  %106 = vmatpush1.bf16.msra.mxu0 0
  %107 = vmatprep.subr.bf16.mxu0 0
  %108 = vmatpush1.bf16.msra.mxu0 0
  %109 = vmatprep.subr.bf16.mxu0 0
  %110 = vmatpush1.bf16.msra.mxu0 0
  %111 = vmatprep.subr.bf16.mxu0 0
  %112 = vmatpush1.bf16.msra.mxu0 0
  %113 = vmatprep.subr.bf16.mxu0 0
  %114 = vmatpush1.bf16.msra.mxu0 0
  %115 = vmatprep.subr.bf16.mxu0 0
  %116 = vmatpush1.bf16.msra.mxu0 0
  %117 = vmatprep.subr.bf16.mxu0 0
  %118 = vmatpush1.bf16.msra.mxu0 0
  %119 = vmatprep.mubr.bf16.mxu0 0
  %120 = vmatmul.mubr.bf16.gmra.mrb[0].mxu0 %v78
  %v121 = vpop.f32.mrb[0].mxu0
  %v122 = vadd.f32 %v34, %v121
  %v123 = vpop.f32.mrb[0].mxu0
  %v124 = vpop.f32.mrb[0].mxu0
  %v125 = vadd.f32 %v39, %v124
  %v126 = vpop.f32.mrb[0].mxu0
  %127 = vmatprep.mubr.bf16.mxu0 0
  %128 = vmatmul.mubr.bf16.gmra.mrb[0].mxu0 %v81
  %v129 = vpop.f32.mrb[0].mxu0
  %v130 = vadd.f32 %v44, %v129
  %v131 = vpop.f32.mrb[0].mxu0
  %v132 = vpop.f32.mrb[0].mxu0
  %v133 = vadd.f32 %v49, %v132
  %v134 = vpop.f32.mrb[0].mxu0
  %135 = vdwg.mxu0
  %v136 = vld [vmem:[%s2] sm:$0xff]
  %v137 = vld [vmem:[%s2 + $0x8] sm:$0xff]
  %v138 = vld [vmem:[%s2 + $0x10] sm:$0xff]
  %v139 = vld [vmem:[%s2 + $0x18] sm:$0xff]
  %v140 = vmul.f32 %v122, %v122
  %v141 = vmul.f32 %v125, %v125
  %v142 = vmul.f32 %v130, %v130
  %v143 = vmul.f32 %v133, %v133
  %vm144 = vcmask 261120
  %v146 = vsel %vm144, %v136, 0
  %v149 = vsel %vm144, %v137, 0
  %v152 = vsel %vm144, %v138, 0
  %v155 = vsel %vm144, %v139, 0
  %157 = vmatprep.subr.mxu0 0.0
  %v158 = vand.u32 %v140, 4294901760
  %159 = vmatpush1.msra.mxu0 %v158
  %160 = vmatprep.subr.mxu0 0.0
  %v161 = vand.u32 %v141, 4294901760
  %162 = vmatpush1.msra.mxu0 %v161
  %163 = vmatprep.subr.mxu0 0.0
  %v164 = vand.u32 %v142, 4294901760
  %165 = vmatpush1.msra.mxu0 %v164
  %166 = vmatprep.subr.mxu0 0.0
  %v167 = vand.u32 %v143, 4294901760
  %168 = vmatpush1.msra.mxu0 %v167
  %169 = vmatprep.subr.mxu0 0.0
  %170 = vmatpush1.msra.mxu0 0.0
  %171 = vmatprep.subr.mxu0 0.0
  %172 = vmatpush1.msra.mxu0 0.0
  %173 = vmatprep.subr.mxu0 0.0
  %174 = vmatpush1.msra.mxu0 0.0
  %175 = vmatprep.subr.mxu0 0.0
  %176 = vmatpush1.msra.mxu0 0.0
  %177 = vmatprep.subr.mxu0 0.0
  %178 = vmatpush1.msra.mxu0 0.0
  %179 = vmatprep.subr.mxu0 0.0
  %180 = vmatpush1.msra.mxu0 0.0
  %181 = vmatprep.subr.mxu0 0.0
  %182 = vmatpush1.msra.mxu0 0.0
  %183 = vmatprep.subr.mxu0 0.0
  %184 = vmatpush1.msra.mxu0 0.0
  %185 = vmatprep.subr.mxu0 0.0
  %186 = vmatpush1.msra.mxu0 0.0
  %187 = vmatprep.subr.mxu0 0.0
  %188 = vmatpush1.msra.mxu0 0.0
  %189 = vmatprep.subr.mxu0 0.0
  %190 = vmatpush1.msra.mxu0 0.0
  %191 = vmatprep.subr.mxu0 0.0
  %192 = vmatpush1.msra.mxu0 0.0
  %193 = vmatprep.subr.mxu0 0.0
  %194 = vmatpush1.msra.mxu0 0.0
  %195 = vmatprep.subr.mxu0 0.0
  %196 = vmatpush1.msra.mxu0 0.0
  %197 = vmatprep.subr.mxu0 0.0
  %198 = vmatpush1.msra.mxu0 0.0
  %199 = vmatprep.subr.mxu0 0.0
  %200 = vmatpush1.msra.mxu0 0.0
  %201 = vmatprep.subr.mxu0 0.0
  %202 = vmatpush1.msra.mxu0 0.0
  %203 = vmatprep.subr.mxu0 0.0
  %204 = vmatpush1.msra.mxu0 0.0
  %205 = vmatprep.subr.mxu0 0.0
  %206 = vmatpush1.msra.mxu0 0.0
  %207 = vmatprep.subr.mxu0 0.0
  %208 = vmatpush1.msra.mxu0 0.0
  %209 = vmatprep.subr.mxu0 0.0
  %210 = vmatpush1.msra.mxu0 0.0
  %211 = vmatprep.subr.mxu0 0.0
  %212 = vmatpush1.msra.mxu0 0.0
  %213 = vmatprep.subr.mxu0 0.0
  %214 = vmatpush1.msra.mxu0 0.0
  %215 = vmatprep.subr.mxu0 0.0
  %216 = vmatpush1.msra.mxu0 0.0
  %217 = vmatprep.subr.mxu0 0.0
  %218 = vmatpush1.msra.mxu0 0.0
  %219 = vmatprep.subr.mxu0 0.0
  %220 = vmatpush1.msra.mxu0 0.0
  %221 = vmatprep.subr.mxu0 0.0
  %222 = vmatpush1.msra.mxu0 0.0
  %223 = vmatprep.subr.mxu0 0.0
  %224 = vmatpush1.msra.mxu0 0.0
  %225 = vmatprep.mubr.f32.mxu0 0.0
  %v226 = vand.u32 %v146, 4294901760
  %v227 = vsub.f32 %v146, %v226
  %v228 = vand.u32 %v227, 4294901760
  %v229 = vsub.f32 %v227, %v228
  %v230 = vand.u32 %v229, 4294901760
  %231 = vmatmul.mubr.f32.gmra.mrb[0].mxu0 %v230
  %v232 = vpop.f32.mrb[0].mxu0
  %v233 = vadd.f32 0.0, %v232
  %v234 = vpop.f32.mrb[0].mxu0
  %235 = vmatprep.mubr.f32.mxu0 0.0
  %v236 = vand.u32 %v149, 4294901760
  %v237 = vsub.f32 %v149, %v236
  %v238 = vand.u32 %v237, 4294901760
  %v239 = vsub.f32 %v237, %v238
  %v240 = vand.u32 %v239, 4294901760
  %241 = vmatmul.mubr.f32.gmra.mrb[0].mxu0 %v240
  %v242 = vpop.f32.mrb[0].mxu0
  %v243 = vadd.f32 0.0, %v242
  %v244 = vpop.f32.mrb[0].mxu0
  %245 = vmatprep.mubr.f32.mxu0 0.0
  %v246 = vand.u32 %v152, 4294901760
  %v247 = vsub.f32 %v152, %v246
  %v248 = vand.u32 %v247, 4294901760
  %v249 = vsub.f32 %v247, %v248
  %v250 = vand.u32 %v249, 4294901760
  %251 = vmatmul.mubr.f32.gmra.mrb[0].mxu0 %v250
  %v252 = vpop.f32.mrb[0].mxu0
  %v253 = vadd.f32 0.0, %v252
  %v254 = vpop.f32.mrb[0].mxu0
  %255 = vmatprep.mubr.f32.mxu0 0.0
  %v256 = vand.u32 %v155, 4294901760
  %v257 = vsub.f32 %v155, %v256
  %v258 = vand.u32 %v257, 4294901760
  %v259 = vsub.f32 %v257, %v258
  %v260 = vand.u32 %v259, 4294901760
  %261 = vmatmul.mubr.f32.gmra.mrb[0].mxu0 %v260
  %v262 = vpop.f32.mrb[0].mxu0
  %v263 = vadd.f32 0.0, %v262
  %v264 = vpop.f32.mrb[0].mxu0
  %265 = vdwg.mxu0
  %266 = vmatprep.subr.mxu0 0.0
  %v267 = vand.u32 %v140, 4294901760
  %v268 = vsub.f32 %v140, %v267
  %v269 = vand.u32 %v268, 4294901760
  %v270 = vsub.f32 %v268, %v269
  %v271 = vand.u32 %v270, 4294901760
  %272 = vmatpush1.msra.mxu0 %v271
  %273 = vmatprep.subr.mxu0 0.0
  %v274 = vand.u32 %v141, 4294901760
  %v275 = vsub.f32 %v141, %v274
  %v276 = vand.u32 %v275, 4294901760
  %v277 = vsub.f32 %v275, %v276
  %v278 = vand.u32 %v277, 4294901760
  %279 = vmatpush1.msra.mxu0 %v278
  %280 = vmatprep.subr.mxu0 0.0
  %v281 = vand.u32 %v142, 4294901760
  %v282 = vsub.f32 %v142, %v281
  %v283 = vand.u32 %v282, 4294901760
  %v284 = vsub.f32 %v282, %v283
  %v285 = vand.u32 %v284, 4294901760
  %286 = vmatpush1.msra.mxu0 %v285
  %287 = vmatprep.subr.mxu0 0.0
  %v288 = vand.u32 %v143, 4294901760
  %v289 = vsub.f32 %v143, %v288
  %v290 = vand.u32 %v289, 4294901760
  %v291 = vsub.f32 %v289, %v290
  %v292 = vand.u32 %v291, 4294901760
  %293 = vmatpush1.msra.mxu0 %v292
  %294 = vmatprep.subr.mxu0 0.0
  %295 = vmatpush1.msra.mxu0 0.0
  %296 = vmatprep.subr.mxu0 0.0
  %297 = vmatpush1.msra.mxu0 0.0
  %298 = vmatprep.subr.mxu0 0.0
  %299 = vmatpush1.msra.mxu0 0.0
  %300 = vmatprep.subr.mxu0 0.0
  %301 = vmatpush1.msra.mxu0 0.0
  %302 = vmatprep.subr.mxu0 0.0
  %303 = vmatpush1.msra.mxu0 0.0
  %304 = vmatprep.subr.mxu0 0.0
  %305 = vmatpush1.msra.mxu0 0.0
  %306 = vmatprep.subr.mxu0 0.0
  %307 = vmatpush1.msra.mxu0 0.0
  %308 = vmatprep.subr.mxu0 0.0
  %309 = vmatpush1.msra.mxu0 0.0
  %310 = vmatprep.subr.mxu0 0.0
  %311 = vmatpush1.msra.mxu0 0.0
  %312 = vmatprep.subr.mxu0 0.0
  %313 = vmatpush1.msra.mxu0 0.0
  %314 = vmatprep.subr.mxu0 0.0
  %315 = vmatpush1.msra.mxu0 0.0
  %316 = vmatprep.subr.mxu0 0.0
  %317 = vmatpush1.msra.mxu0 0.0
  %318 = vmatprep.subr.mxu0 0.0
  %319 = vmatpush1.msra.mxu0 0.0
  %320 = vmatprep.subr.mxu0 0.0
  %321 = vmatpush1.msra.mxu0 0.0
  %322 = vmatprep.subr.mxu0 0.0
  %323 = vmatpush1.msra.mxu0 0.0
  %324 = vmatprep.subr.mxu0 0.0
  %325 = vmatpush1.msra.mxu0 0.0
  %326 = vmatprep.subr.mxu0 0.0
  %327 = vmatpush1.msra.mxu0 0.0
  %328 = vmatprep.subr.mxu0 0.0
  %329 = vmatpush1.msra.mxu0 0.0
  %330 = vmatprep.subr.mxu0 0.0
  %331 = vmatpush1.msra.mxu0 0.0
  %332 = vmatprep.subr.mxu0 0.0
  %333 = vmatpush1.msra.mxu0 0.0
  %334 = vmatprep.subr.mxu0 0.0
  %335 = vmatpush1.msra.mxu0 0.0
  %336 = vmatprep.subr.mxu0 0.0
  %337 = vmatpush1.msra.mxu0 0.0
  %338 = vmatprep.subr.mxu0 0.0
  %339 = vmatpush1.msra.mxu0 0.0
  %340 = vmatprep.subr.mxu0 0.0
  %341 = vmatpush1.msra.mxu0 0.0
  %342 = vmatprep.subr.mxu0 0.0
  %343 = vmatpush1.msra.mxu0 0.0
  %344 = vmatprep.subr.mxu0 0.0
  %345 = vmatpush1.msra.mxu0 0.0
  %346 = vmatprep.subr.mxu0 0.0
  %347 = vmatpush1.msra.mxu0 0.0
  %348 = vmatprep.subr.mxu0 0.0
  %349 = vmatpush1.msra.mxu0 0.0
  %350 = vmatprep.mubr.f32.mxu0 0.0
  %v351 = vand.u32 %v146, 4294901760
  %352 = vmatmul.mubr.f32.gmra.mrb[0].mxu0 %v351
  %v353 = vpop.f32.mrb[0].mxu0
  %v354 = vadd.f32 %v233, %v353
  %v355 = vpop.f32.mrb[0].mxu0
  %356 = vmatprep.mubr.f32.mxu0 0.0
  %v357 = vand.u32 %v149, 4294901760
  %358 = vmatmul.mubr.f32.gmra.mrb[0].mxu0 %v357
  %v359 = vpop.f32.mrb[0].mxu0
  %v360 = vadd.f32 %v243, %v359
  %v361 = vpop.f32.mrb[0].mxu0
  %362 = vmatprep.mubr.f32.mxu0 0.0
  %v363 = vand.u32 %v152, 4294901760
  %364 = vmatmul.mubr.f32.gmra.mrb[0].mxu0 %v363
  %v365 = vpop.f32.mrb[0].mxu0
  %v366 = vadd.f32 %v253, %v365
  %v367 = vpop.f32.mrb[0].mxu0
  %368 = vmatprep.mubr.f32.mxu0 0.0
  %v369 = vand.u32 %v155, 4294901760
  %370 = vmatmul.mubr.f32.gmra.mrb[0].mxu0 %v369
  %v371 = vpop.f32.mrb[0].mxu0
  %v372 = vadd.f32 %v263, %v371
  %v373 = vpop.f32.mrb[0].mxu0
  %374 = vdwg.mxu0
  %375 = vmatprep.subr.mxu0 0.0
  %v376 = vand.u32 %v140, 4294901760
  %v377 = vsub.f32 %v140, %v376
  %378 = vmatpush1.msra.mxu0 %v377
  %379 = vmatprep.subr.mxu0 0.0
  %v380 = vand.u32 %v141, 4294901760
  %v381 = vsub.f32 %v141, %v380
  %382 = vmatpush1.msra.mxu0 %v381
  %383 = vmatprep.subr.mxu0 0.0
  %v384 = vand.u32 %v142, 4294901760
  %v385 = vsub.f32 %v142, %v384
  %386 = vmatpush1.msra.mxu0 %v385
  %387 = vmatprep.subr.mxu0 0.0
  %v388 = vand.u32 %v143, 4294901760
  %v389 = vsub.f32 %v143, %v388
  %390 = vmatpush1.msra.mxu0 %v389
  %391 = vmatprep.subr.mxu0 0.0
  %392 = vmatpush1.msra.mxu0 0.0
  %393 = vmatprep.subr.mxu0 0.0
  %394 = vmatpush1.msra.mxu0 0.0
  %395 = vmatprep.subr.mxu0 0.0
  %396 = vmatpush1.msra.mxu0 0.0
  %397 = vmatprep.subr.mxu0 0.0
  %398 = vmatpush1.msra.mxu0 0.0
  %399 = vmatprep.subr.mxu0 0.0
  %400 = vmatpush1.msra.mxu0 0.0
  %401 = vmatprep.subr.mxu0 0.0
  %402 = vmatpush1.msra.mxu0 0.0
  %403 = vmatprep.subr.mxu0 0.0
  %404 = vmatpush1.msra.mxu0 0.0
  %405 = vmatprep.subr.mxu0 0.0
  %406 = vmatpush1.msra.mxu0 0.0
  %407 = vmatprep.subr.mxu0 0.0
  %408 = vmatpush1.msra.mxu0 0.0
  %409 = vmatprep.subr.mxu0 0.0
  %410 = vmatpush1.msra.mxu0 0.0
  %411 = vmatprep.subr.mxu0 0.0
  %412 = vmatpush1.msra.mxu0 0.0
  %413 = vmatprep.subr.mxu0 0.0
  %414 = vmatpush1.msra.mxu0 0.0
  %415 = vmatprep.subr.mxu0 0.0
  %416 = vmatpush1.msra.mxu0 0.0
  %417 = vmatprep.subr.mxu0 0.0
  %418 = vmatpush1.msra.mxu0 0.0
  %419 = vmatprep.subr.mxu0 0.0
  %420 = vmatpush1.msra.mxu0 0.0
  %421 = vmatprep.subr.mxu0 0.0
  %422 = vmatpush1.msra.mxu0 0.0
  %423 = vmatprep.subr.mxu0 0.0
  %424 = vmatpush1.msra.mxu0 0.0
  %425 = vmatprep.subr.mxu0 0.0
  %426 = vmatpush1.msra.mxu0 0.0
  %427 = vmatprep.subr.mxu0 0.0
  %428 = vmatpush1.msra.mxu0 0.0
  %429 = vmatprep.subr.mxu0 0.0
  %430 = vmatpush1.msra.mxu0 0.0
  %431 = vmatprep.subr.mxu0 0.0
  %432 = vmatpush1.msra.mxu0 0.0
  %433 = vmatprep.subr.mxu0 0.0
  %434 = vmatpush1.msra.mxu0 0.0
  %435 = vmatprep.subr.mxu0 0.0
  %436 = vmatpush1.msra.mxu0 0.0
  %437 = vmatprep.subr.mxu0 0.0
  %438 = vmatpush1.msra.mxu0 0.0
  %439 = vmatprep.subr.mxu0 0.0
  %440 = vmatpush1.msra.mxu0 0.0
  %441 = vmatprep.subr.mxu0 0.0
  %442 = vmatpush1.msra.mxu0 0.0
  %443 = vmatprep.subr.mxu0 0.0
  %444 = vmatpush1.msra.mxu0 0.0
  %445 = vmatprep.subr.mxu0 0.0
  %446 = vmatpush1.msra.mxu0 0.0
  %447 = vmatprep.mubr.f32.mxu0 0.0
  %v448 = vand.u32 %v146, 4294901760
  %v449 = vsub.f32 %v146, %v448
  %450 = vmatmul.mubr.f32.gmra.mrb[0].mxu0 %v449
  %v451 = vpop.f32.mrb[0].mxu0
  %v452 = vadd.f32 %v354, %v451
  %v453 = vpop.f32.mrb[0].mxu0
  %454 = vmatprep.mubr.f32.mxu0 0.0
  %v455 = vand.u32 %v149, 4294901760
  %v456 = vsub.f32 %v149, %v455
  %457 = vmatmul.mubr.f32.gmra.mrb[0].mxu0 %v456
  %v458 = vpop.f32.mrb[0].mxu0
  %v459 = vadd.f32 %v360, %v458
  %v460 = vpop.f32.mrb[0].mxu0
  %461 = vmatprep.mubr.f32.mxu0 0.0
  %v462 = vand.u32 %v152, 4294901760
  %v463 = vsub.f32 %v152, %v462
  %464 = vmatmul.mubr.f32.gmra.mrb[0].mxu0 %v463
  %v465 = vpop.f32.mrb[0].mxu0
  %v466 = vadd.f32 %v366, %v465
  %v467 = vpop.f32.mrb[0].mxu0
  %468 = vmatprep.mubr.f32.mxu0 0.0
  %v469 = vand.u32 %v155, 4294901760
  %v470 = vsub.f32 %v155, %v469
  %471 = vmatmul.mubr.f32.gmra.mrb[0].mxu0 %v470
  %v472 = vpop.f32.mrb[0].mxu0
  %v473 = vadd.f32 %v372, %v472
  %v474 = vpop.f32.mrb[0].mxu0
  %475 = vdwg.mxu0
  %476 = vmatprep.subr.mxu0 0.0
  %v477 = vand.u32 %v140, 4294901760
  %478 = vmatpush1.msra.mxu0 %v477
  %479 = vmatprep.subr.mxu0 0.0
  %v480 = vand.u32 %v141, 4294901760
  %481 = vmatpush1.msra.mxu0 %v480
  %482 = vmatprep.subr.mxu0 0.0
  %v483 = vand.u32 %v142, 4294901760
  %484 = vmatpush1.msra.mxu0 %v483
  %485 = vmatprep.subr.mxu0 0.0
  %v486 = vand.u32 %v143, 4294901760
  %487 = vmatpush1.msra.mxu0 %v486
  %488 = vmatprep.subr.mxu0 0.0
  %489 = vmatpush1.msra.mxu0 0.0
  %490 = vmatprep.subr.mxu0 0.0
  %491 = vmatpush1.msra.mxu0 0.0
  %492 = vmatprep.subr.mxu0 0.0
  %493 = vmatpush1.msra.mxu0 0.0
  %494 = vmatprep.subr.mxu0 0.0
  %495 = vmatpush1.msra.mxu0 0.0
  %496 = vmatprep.subr.mxu0 0.0
  %497 = vmatpush1.msra.mxu0 0.0
  %498 = vmatprep.subr.mxu0 0.0
  %499 = vmatpush1.msra.mxu0 0.0
  %500 = vmatprep.subr.mxu0 0.0
  %501 = vmatpush1.msra.mxu0 0.0
  %502 = vmatprep.subr.mxu0 0.0
  %503 = vmatpush1.msra.mxu0 0.0
  %504 = vmatprep.subr.mxu0 0.0
  %505 = vmatpush1.msra.mxu0 0.0
  %506 = vmatprep.subr.mxu0 0.0
  %507 = vmatpush1.msra.mxu0 0.0
  %508 = vmatprep.subr.mxu0 0.0
  %509 = vmatpush1.msra.mxu0 0.0
  %510 = vmatprep.subr.mxu0 0.0
  %511 = vmatpush1.msra.mxu0 0.0
  %512 = vmatprep.subr.mxu0 0.0
  %513 = vmatpush1.msra.mxu0 0.0
  %514 = vmatprep.subr.mxu0 0.0
  %515 = vmatpush1.msra.mxu0 0.0
  %516 = vmatprep.subr.mxu0 0.0
  %517 = vmatpush1.msra.mxu0 0.0
  %518 = vmatprep.subr.mxu0 0.0
  %519 = vmatpush1.msra.mxu0 0.0
  %520 = vmatprep.subr.mxu0 0.0
  %521 = vmatpush1.msra.mxu0 0.0
  %522 = vmatprep.subr.mxu0 0.0
  %523 = vmatpush1.msra.mxu0 0.0
  %524 = vmatprep.subr.mxu0 0.0
  %525 = vmatpush1.msra.mxu0 0.0
  %526 = vmatprep.subr.mxu0 0.0
  %527 = vmatpush1.msra.mxu0 0.0
  %528 = vmatprep.subr.mxu0 0.0
  %529 = vmatpush1.msra.mxu0 0.0
  %530 = vmatprep.subr.mxu0 0.0
  %531 = vmatpush1.msra.mxu0 0.0
  %532 = vmatprep.subr.mxu0 0.0
  %533 = vmatpush1.msra.mxu0 0.0
  %534 = vmatprep.subr.mxu0 0.0
  %535 = vmatpush1.msra.mxu0 0.0
  %536 = vmatprep.subr.mxu0 0.0
  %537 = vmatpush1.msra.mxu0 0.0
  %538 = vmatprep.subr.mxu0 0.0
  %539 = vmatpush1.msra.mxu0 0.0
  %540 = vmatprep.subr.mxu0 0.0
  %541 = vmatpush1.msra.mxu0 0.0
  %542 = vmatprep.subr.mxu0 0.0
  %543 = vmatpush1.msra.mxu0 0.0
  %544 = vmatprep.mubr.f32.mxu0 0.0
  %v545 = vand.u32 %v146, 4294901760
  %v546 = vsub.f32 %v146, %v545
  %v547 = vand.u32 %v546, 4294901760
  %548 = vmatmul.mubr.f32.gmra.mrb[0].mxu0 %v547
  %v549 = vpop.f32.mrb[0].mxu0
  %v550 = vadd.f32 %v452, %v549
  %v551 = vpop.f32.mrb[0].mxu0
  %552 = vmatprep.mubr.f32.mxu0 0.0
  %v553 = vand.u32 %v149, 4294901760
  %v554 = vsub.f32 %v149, %v553
  %v555 = vand.u32 %v554, 4294901760
  %556 = vmatmul.mubr.f32.gmra.mrb[0].mxu0 %v555
  %v557 = vpop.f32.mrb[0].mxu0
  %v558 = vadd.f32 %v459, %v557
  %v559 = vpop.f32.mrb[0].mxu0
  %560 = vmatprep.mubr.f32.mxu0 0.0
  %v561 = vand.u32 %v152, 4294901760
  %v562 = vsub.f32 %v152, %v561
  %v563 = vand.u32 %v562, 4294901760
  %564 = vmatmul.mubr.f32.gmra.mrb[0].mxu0 %v563
  %v565 = vpop.f32.mrb[0].mxu0
  %v566 = vadd.f32 %v466, %v565
  %v567 = vpop.f32.mrb[0].mxu0
  %568 = vmatprep.mubr.f32.mxu0 0.0
  %v569 = vand.u32 %v155, 4294901760
  %v570 = vsub.f32 %v155, %v569
  %v571 = vand.u32 %v570, 4294901760
  %572 = vmatmul.mubr.f32.gmra.mrb[0].mxu0 %v571
  %v573 = vpop.f32.mrb[0].mxu0
  %v574 = vadd.f32 %v473, %v573
  %v575 = vpop.f32.mrb[0].mxu0
  %576 = vdwg.mxu0
  %577 = vmatprep.subr.mxu0 0.0
  %v578 = vand.u32 %v140, 4294901760
  %v579 = vsub.f32 %v140, %v578
  %v580 = vand.u32 %v579, 4294901760
  %581 = vmatpush1.msra.mxu0 %v580
  %582 = vmatprep.subr.mxu0 0.0
  %v583 = vand.u32 %v141, 4294901760
  %v584 = vsub.f32 %v141, %v583
  %v585 = vand.u32 %v584, 4294901760
  %586 = vmatpush1.msra.mxu0 %v585
  %587 = vmatprep.subr.mxu0 0.0
  %v588 = vand.u32 %v142, 4294901760
  %v589 = vsub.f32 %v142, %v588
  %v590 = vand.u32 %v589, 4294901760
  %591 = vmatpush1.msra.mxu0 %v590
  %592 = vmatprep.subr.mxu0 0.0
  %v593 = vand.u32 %v143, 4294901760
  %v594 = vsub.f32 %v143, %v593
  %v595 = vand.u32 %v594, 4294901760
  %596 = vmatpush1.msra.mxu0 %v595
  %597 = vmatprep.subr.mxu0 0.0
  %598 = vmatpush1.msra.mxu0 0.0
  %599 = vmatprep.subr.mxu0 0.0
  %600 = vmatpush1.msra.mxu0 0.0
  %601 = vmatprep.subr.mxu0 0.0
  %602 = vmatpush1.msra.mxu0 0.0
  %603 = vmatprep.subr.mxu0 0.0
  %604 = vmatpush1.msra.mxu0 0.0
  %605 = vmatprep.subr.mxu0 0.0
  %606 = vmatpush1.msra.mxu0 0.0
  %607 = vmatprep.subr.mxu0 0.0
  %608 = vmatpush1.msra.mxu0 0.0
  %609 = vmatprep.subr.mxu0 0.0
  %610 = vmatpush1.msra.mxu0 0.0
  %611 = vmatprep.subr.mxu0 0.0
  %612 = vmatpush1.msra.mxu0 0.0
  %613 = vmatprep.subr.mxu0 0.0
  %614 = vmatpush1.msra.mxu0 0.0
  %615 = vmatprep.subr.mxu0 0.0
  %616 = vmatpush1.msra.mxu0 0.0
  %617 = vmatprep.subr.mxu0 0.0
  %618 = vmatpush1.msra.mxu0 0.0
  %619 = vmatprep.subr.mxu0 0.0
  %620 = vmatpush1.msra.mxu0 0.0
  %621 = vmatprep.subr.mxu0 0.0
  %622 = vmatpush1.msra.mxu0 0.0
  %623 = vmatprep.subr.mxu0 0.0
  %624 = vmatpush1.msra.mxu0 0.0
  %625 = vmatprep.subr.mxu0 0.0
  %626 = vmatpush1.msra.mxu0 0.0
  %627 = vmatprep.subr.mxu0 0.0
  %628 = vmatpush1.msra.mxu0 0.0
  %629 = vmatprep.subr.mxu0 0.0
  %630 = vmatpush1.msra.mxu0 0.0
  %631 = vmatprep.subr.mxu0 0.0
  %632 = vmatpush1.msra.mxu0 0.0
  %633 = vmatprep.subr.mxu0 0.0
  %634 = vmatpush1.msra.mxu0 0.0
  %635 = vmatprep.subr.mxu0 0.0
  %636 = vmatpush1.msra.mxu0 0.0
  %637 = vmatprep.subr.mxu0 0.0
  %638 = vmatpush1.msra.mxu0 0.0
  %639 = vmatprep.subr.mxu0 0.0
  %640 = vmatpush1.msra.mxu0 0.0
  %641 = vmatprep.subr.mxu0 0.0
  %642 = vmatpush1.msra.mxu0 0.0
  %643 = vmatprep.subr.mxu0 0.0
  %644 = vmatpush1.msra.mxu0 0.0
  %645 = vmatprep.subr.mxu0 0.0
  %646 = vmatpush1.msra.mxu0 0.0
  %647 = vmatprep.subr.mxu0 0.0
  %648 = vmatpush1.msra.mxu0 0.0
  %649 = vmatprep.subr.mxu0 0.0
  %650 = vmatpush1.msra.mxu0 0.0
  %651 = vmatprep.subr.mxu0 0.0
  %652 = vmatpush1.msra.mxu0 0.0
  %653 = vmatprep.mubr.f32.mxu0 0.0
  %v654 = vand.u32 %v146, 4294901760
  %655 = vmatmul.mubr.f32.gmra.mrb[0].mxu0 %v654
  %v656 = vpop.f32.mrb[0].mxu0
  %v657 = vadd.f32 %v550, %v656
  %v658 = vpop.f32.mrb[0].mxu0
  %659 = vmatprep.mubr.f32.mxu0 0.0
  %v660 = vand.u32 %v149, 4294901760
  %661 = vmatmul.mubr.f32.gmra.mrb[0].mxu0 %v660
  %v662 = vpop.f32.mrb[0].mxu0
  %v663 = vadd.f32 %v558, %v662
  %v664 = vpop.f32.mrb[0].mxu0
  %665 = vmatprep.mubr.f32.mxu0 0.0
  %v666 = vand.u32 %v152, 4294901760
  %667 = vmatmul.mubr.f32.gmra.mrb[0].mxu0 %v666
  %v668 = vpop.f32.mrb[0].mxu0
  %v669 = vadd.f32 %v566, %v668
  %v670 = vpop.f32.mrb[0].mxu0
  %671 = vmatprep.mubr.f32.mxu0 0.0
  %v672 = vand.u32 %v155, 4294901760
  %673 = vmatmul.mubr.f32.gmra.mrb[0].mxu0 %v672
  %v674 = vpop.f32.mrb[0].mxu0
  %v675 = vadd.f32 %v574, %v674
  %v676 = vpop.f32.mrb[0].mxu0
  %677 = vdwg.mxu0
  %678 = vmatprep.subr.mxu0 0.0
  %v679 = vand.u32 %v140, 4294901760
  %680 = vmatpush1.msra.mxu0 %v679
  %681 = vmatprep.subr.mxu0 0.0
  %v682 = vand.u32 %v141, 4294901760
  %683 = vmatpush1.msra.mxu0 %v682
  %684 = vmatprep.subr.mxu0 0.0
  %v685 = vand.u32 %v142, 4294901760
  %686 = vmatpush1.msra.mxu0 %v685
  %687 = vmatprep.subr.mxu0 0.0
  %v688 = vand.u32 %v143, 4294901760
  %689 = vmatpush1.msra.mxu0 %v688
  %690 = vmatprep.subr.mxu0 0.0
  %691 = vmatpush1.msra.mxu0 0.0
  %692 = vmatprep.subr.mxu0 0.0
  %693 = vmatpush1.msra.mxu0 0.0
  %694 = vmatprep.subr.mxu0 0.0
  %695 = vmatpush1.msra.mxu0 0.0
  %696 = vmatprep.subr.mxu0 0.0
  %697 = vmatpush1.msra.mxu0 0.0
  %698 = vmatprep.subr.mxu0 0.0
  %699 = vmatpush1.msra.mxu0 0.0
  %700 = vmatprep.subr.mxu0 0.0
  %701 = vmatpush1.msra.mxu0 0.0
  %702 = vmatprep.subr.mxu0 0.0
  %703 = vmatpush1.msra.mxu0 0.0
  %704 = vmatprep.subr.mxu0 0.0
  %705 = vmatpush1.msra.mxu0 0.0
  %706 = vmatprep.subr.mxu0 0.0
  %707 = vmatpush1.msra.mxu0 0.0
  %708 = vmatprep.subr.mxu0 0.0
  %709 = vmatpush1.msra.mxu0 0.0
  %710 = vmatprep.subr.mxu0 0.0
  %711 = vmatpush1.msra.mxu0 0.0
  %712 = vmatprep.subr.mxu0 0.0
  %713 = vmatpush1.msra.mxu0 0.0
  %714 = vmatprep.subr.mxu0 0.0
  %715 = vmatpush1.msra.mxu0 0.0
  %716 = vmatprep.subr.mxu0 0.0
  %717 = vmatpush1.msra.mxu0 0.0
  %718 = vmatprep.subr.mxu0 0.0
  %719 = vmatpush1.msra.mxu0 0.0
  %720 = vmatprep.subr.mxu0 0.0
  %721 = vmatpush1.msra.mxu0 0.0
  %722 = vmatprep.subr.mxu0 0.0
  %723 = vmatpush1.msra.mxu0 0.0
  %724 = vmatprep.subr.mxu0 0.0
  %725 = vmatpush1.msra.mxu0 0.0
  %726 = vmatprep.subr.mxu0 0.0
  %727 = vmatpush1.msra.mxu0 0.0
  %728 = vmatprep.subr.mxu0 0.0
  %729 = vmatpush1.msra.mxu0 0.0
  %730 = vmatprep.subr.mxu0 0.0
  %731 = vmatpush1.msra.mxu0 0.0
  %732 = vmatprep.subr.mxu0 0.0
  %733 = vmatpush1.msra.mxu0 0.0
  %734 = vmatprep.subr.mxu0 0.0
  %735 = vmatpush1.msra.mxu0 0.0
  %736 = vmatprep.subr.mxu0 0.0
  %737 = vmatpush1.msra.mxu0 0.0
  %738 = vmatprep.subr.mxu0 0.0
  %739 = vmatpush1.msra.mxu0 0.0
  %740 = vmatprep.subr.mxu0 0.0
  %741 = vmatpush1.msra.mxu0 0.0
  %742 = vmatprep.subr.mxu0 0.0
  %743 = vmatpush1.msra.mxu0 0.0
  %744 = vmatprep.subr.mxu0 0.0
  %745 = vmatpush1.msra.mxu0 0.0
  %746 = vmatprep.mubr.f32.mxu0 0.0
  %v747 = vand.u32 %v146, 4294901760
  %748 = vmatmul.mubr.f32.gmra.mrb[0].mxu0 %v747
  %v749 = vpop.f32.mrb[0].mxu0
  %v750 = vadd.f32 %v657, %v749
  %v751 = vpop.f32.mrb[0].mxu0
  %752 = vmatprep.mubr.f32.mxu0 0.0
  %v753 = vand.u32 %v149, 4294901760
  %754 = vmatmul.mubr.f32.gmra.mrb[0].mxu0 %v753
  %v755 = vpop.f32.mrb[0].mxu0
  %v756 = vadd.f32 %v663, %v755
  %v757 = vpop.f32.mrb[0].mxu0
  %758 = vmatprep.mubr.f32.mxu0 0.0
  %v759 = vand.u32 %v152, 4294901760
  %760 = vmatmul.mubr.f32.gmra.mrb[0].mxu0 %v759
  %v761 = vpop.f32.mrb[0].mxu0
  %v762 = vadd.f32 %v669, %v761
  %v763 = vpop.f32.mrb[0].mxu0
  %764 = vmatprep.mubr.f32.mxu0 0.0
  %v765 = vand.u32 %v155, 4294901760
  %766 = vmatmul.mubr.f32.gmra.mrb[0].mxu0 %v765
  %v767 = vpop.f32.mrb[0].mxu0
  %v768 = vadd.f32 %v675, %v767
  %v769 = vpop.f32.mrb[0].mxu0
  %770 = vdwg.mxu0
  %v771 = vrsqrt.pop %v750
  %v772 = vrsqrt.pop %v756
  %v773 = vrsqrt.pop %v762
  %v774 = vrsqrt.pop %v768
  %v775 = vmul.f32 %v750, %v771
  %v776 = vmul.f32 %v756, %v772
  %v777 = vmul.f32 %v762, %v773
  %v778 = vmul.f32 %v768, %v774
  %v779 = vadd.f32 %v750, 1.0
  %v780 = vadd.f32 %v756, 1.0
  %v781 = vadd.f32 %v762, 1.0
  %v782 = vadd.f32 %v768, 1.0
  %v783 = vrcp.pop %v779
  %v784 = vrcp.pop %v780
  %v785 = vrcp.pop %v781
  %v786 = vrcp.pop %v782
  %v787 = vmul.f32 %v775, %v783
  %v788 = vmul.f32 %v776, %v784
  %v789 = vmul.f32 %v777, %v785
  %v790 = vmul.f32 %v778, %v786
  %v791 = vmul.f32 %v122, %v787
  %v792 = vmul.f32 %v125, %v788
  %v793 = vmul.f32 %v130, %v789
  %v794 = vmul.f32 %v133, %v790
  %795 = vst [vmem:[%s4] sm:$0xff] %v791
  %796 = vst [vmem:[%s4 + $0x8] sm:$0xff] %v792
  %797 = vst [vmem:[%s4 + $0x10] sm:$0xff] %v793
  %798 = vst [vmem:[%s4 + $0x18] sm:$0xff] %v794
  // Predicated region
  $region18: #{primary_caps_forward.1} parent=0 // pred_check
    _
  $region19: #{primary_caps_forward.1} parent=0 // pred_check_branch
    %800 = sbr.rel (0) target = $region21
  $region20: #{primary_caps_forward.1} parent=0 // pred_region
    _
  $region21: #{primary_caps_forward.1} parent=0 // pred_fallthru
    _
  // Predicated region
  $region22: #{primary_caps_forward.1} parent=0 // pred_check
    _
  $region23: #{primary_caps_forward.1} parent=0 // pred_check_branch
    %802 = sbr.rel (0) target = $region25
  $region24: #{primary_caps_forward.1} parent=0 // pred_region
    _
  $region25: #{primary_caps_forward.1} parent=0 // pred_fallthru
    _

</llo_original>
